<compile_context>
chip_gen: v7x
topology: tpu7x:2x2x1
jax: 0.10.0
libtpu: 0.0.40
codegen_flags: <defaults>
</compile_context>

<pallas_src>
import jax
import jax.numpy as jnp
from jax.experimental import pallas as pl
from jax.experimental.pallas import tpu as pltpu


_LANE = 128
_SUBLANE = 8


def _round_up(n, m):
    return ((n + m - 1) // m) * m


def _mlp_kernel(x_ref, w1_ref, b1_ref, w2_ref, b2_ref, o_ref):
    # Layer 1: [TB, Cin_p] @ [Cin_p, Chid_p] on the MXU, f32 accumulation.
    h = jnp.dot(x_ref[...], w1_ref[...], preferred_element_type=jnp.float32)
    # Bias + ReLU in f32 on the VPU (co-issues while the MXU FIFO drains).
    h = jnp.maximum(h + b1_ref[...], 0.0)
    # Layer 2: recast activations to the weight dtype for the MXU (intentional
    # bf16 downcast of the f32 accumulator when weights are bf16).
    y = jnp.dot(h.astype(w2_ref.dtype), w2_ref[...],
                preferred_element_type=jnp.float32)
    y = jnp.maximum(y + b2_ref[...], 0.0)
    o_ref[...] = y.astype(o_ref.dtype)


def domain_classifier_forward(x, w1, b1, w2, b2, *,
                              compute_dtype=jnp.bfloat16,
                              batch_tile=512):
    """Fused forward of DomainClassifier.

    x : [B, C_in]
    w1: [C_in, C_hid]   (transposed vs. PyTorch nn.Linear.weight)
    b1: [C_hid]
    w2: [C_hid, C_out]
    b2: [C_out]
    returns [B, C_out] in x.dtype
    """
    B, c_in = x.shape
    c_hid = w1.shape[1]
    c_out = w2.shape[1]
    out_dtype = x.dtype

    # ---- lane-dense padding of every feature dim to a multiple of 128 ----
    cin_p = _round_up(c_in, _LANE)
    chid_p = _round_up(c_hid, _LANE)
    cout_p = _round_up(c_out, _LANE)

    # ---- batch handling: pad to sublane multiple; tile only if large ----
    if B > batch_tile:
        tb = batch_tile
    else:
        tb = _round_up(max(B, _SUBLANE), _SUBLANE)
    b_p = _round_up(B, tb)
    grid_steps = b_p // tb

    def pad2(a, rows, cols, dtype):
        a = a.astype(dtype)
        return jnp.pad(a, ((0, rows - a.shape[0]), (0, cols - a.shape[1])))

    x_p = pad2(x, b_p, cin_p, compute_dtype)
    w1_p = pad2(w1, cin_p, chid_p, compute_dtype)
    w2_p = pad2(w2, chid_p, cout_p, compute_dtype)
    # Biases stay f32 (accumulation / VPU work is f32 everywhere).
    b1_p = pad2(b1.reshape(1, c_hid), 1, chid_p, jnp.float32)
    b2_p = pad2(b2.reshape(1, c_out), 1, cout_p, jnp.float32)

    out_shape = jax.ShapeDtypeStruct((b_p, cout_p), out_dtype)

    if grid_steps == 1:
        # Small problem: single invocation, no grid, no pipelining, everything
        # resident in VMEM (whole problem is only a few hundred KB).
        vmem = pltpu.MemorySpace.VMEM
        out_p = pl.pallas_call(
            _mlp_kernel,
            out_shape=out_shape,
            in_specs=[pl.BlockSpec(memory_space=vmem)] * 5,
            out_specs=pl.BlockSpec(memory_space=vmem),
        )(x_p, w1_p, b1_p, w2_p, b2_p)
    else:
        # Large batch: tile rows; weights/biases keep constant block indices so
        # they stay VMEM-resident, x/out are pipelined over the batch.
        out_p = pl.pallas_call(
            _mlp_kernel,
            out_shape=out_shape,
            grid=(grid_steps,),
            in_specs=[
                pl.BlockSpec((tb, cin_p), lambda i: (i, 0)),
                pl.BlockSpec((cin_p, chid_p), lambda i: (0, 0)),
                pl.BlockSpec((1, chid_p), lambda i: (0, 0)),
                pl.BlockSpec((chid_p, cout_p), lambda i: (0, 0)),
                pl.BlockSpec((1, cout_p), lambda i: (0, 0)),
            ],
            out_specs=pl.BlockSpec((tb, cout_p), lambda i: (i, 0)),
            compiler_params=pltpu.CompilerParams(
                dimension_semantics=("parallel",)),
        )(x_p, w1_p, b1_p, w2_p, b2_p)

    return out_p[:B, :c_out]


def _reference_forward(x, w1, b1, w2, b2, compute_dtype):
    """Pure-JAX reference with the same dtype policy as the kernel."""
    h = jnp.dot(x.astype(compute_dtype), w1.astype(compute_dtype),
                preferred_element_type=jnp.float32) + b1
    h = jnp.maximum(h, 0.0)
    y = jnp.dot(h.astype(compute_dtype), w2.astype(compute_dtype),
                preferred_element_type=jnp.float32) + b2
    return jnp.maximum(y, 0.0)


if __name__ == "__main__":
    input_nc = 160          # DomainClassifier defaults
    output_nc = 160
    hidden = input_nc // 2  # 80
    batch = 8

    key = jax.random.PRNGKey(0)
    kx, k1, k2, k3, k4 = jax.random.split(key, 5)

    x = jax.random.normal(kx, (batch, input_nc), dtype=jnp.float32)

    bound1 = 1.0 / (input_nc ** 0.5)
    bound2 = 1.0 / (hidden ** 0.5)
    w1 = jax.random.uniform(k1, (input_nc, hidden), jnp.float32, -bound1, bound1)
    b1 = jax.random.uniform(k2, (hidden,), jnp.float32, -bound1, bound1)
    w2 = jax.random.uniform(k3, (hidden, output_nc), jnp.float32, -bound2, bound2)
    b2 = jax.random.uniform(k4, (output_nc,), jnp.float32, -bound2, bound2)

    # 1) f32 path — strict check against the reference.
    out_f32 = jax.block_until_ready(
        domain_classifier_forward(x, w1, b1, w2, b2, compute_dtype=jnp.float32))
    ref_f32 = _reference_forward(x, w1, b1, w2, b2, jnp.float32)
    assert out_f32.shape == (batch, output_nc)
    assert jnp.allclose(out_f32, ref_f32, atol=1e-5, rtol=1e-5)

    # 2) default bf16-operand / f32-accumulate path — check vs matching-cast ref.
    out_bf16 = jax.block_until_ready(
        domain_classifier_forward(x, w1, b1, w2, b2))
    ref_bf16 = _reference_forward(x, w1, b1, w2, b2, jnp.bfloat16)
    assert out_bf16.shape == (batch, output_nc)
    assert jnp.allclose(out_bf16, ref_bf16, atol=5e-2, rtol=5e-2)

    # 3) batch-tiled path (exercises the parallel grid).
    big_b = 512
    xb = jax.random.normal(kx, (big_b, input_nc), dtype=jnp.float32)
    out_big = jax.block_until_ready(
        domain_classifier_forward(xb, w1, b1, w2, b2,
                                  compute_dtype=jnp.float32, batch_tile=128))
    ref_big = _reference_forward(xb, w1, b1, w2, b2, jnp.float32)
    assert out_big.shape == (big_b, output_nc)
    assert jnp.allclose(out_big, ref_big, atol=1e-4, rtol=1e-4)

    print("KERNEL_OK")
</pallas_src>

<mosaic_0001>
module attributes {stable_mosaic.version = 11 : i64} {
  func.func @_mlp_kernel(%arg0: memref<8x256xf32, #tpu.memory_space<vmem>>, %arg1: memref<256x128xf32, #tpu.memory_space<vmem>>, %arg2: memref<1x128xf32, #tpu.memory_space<vmem>>, %arg3: memref<128x256xf32, #tpu.memory_space<vmem>>, %arg4: memref<1x256xf32, #tpu.memory_space<vmem>>, %arg5: memref<8x256xf32, #tpu.memory_space<vmem>>) attributes {dimension_semantics = [], scalar_prefetch = 0 : i64, scratch_operands = 0 : i64, tpu.core_type = #tpu.core_type<tc>} {
    %c0 = arith.constant 0 : index
    %c0_0 = arith.constant 0 : index
    %0 = vector.load %arg0[%c0, %c0_0] : memref<8x256xf32, #tpu.memory_space<vmem>>, vector<8x256xf32>
    %c0_1 = arith.constant 0 : index
    %c0_2 = arith.constant 0 : index
    %1 = vector.load %arg1[%c0_1, %c0_2] : memref<256x128xf32, #tpu.memory_space<vmem>>, vector<256x128xf32>
    %cst = arith.constant dense<0.000000e+00> : vector<8x128xf32>
    %2 = tpu.matmul %0, %1, %cst {dimension_numbers = #tpu.dot_dimension_numbers<[1], [0], [0], [1], [0, 0, 1, 1], [], []>} : vector<8x256xf32>, vector<256x128xf32>, vector<8x128xf32> -> vector<8x128xf32>
    %c0_3 = arith.constant 0 : index
    %c0_4 = arith.constant 0 : index
    %3 = vector.load %arg2[%c0_3, %c0_4] : memref<1x128xf32, #tpu.memory_space<vmem>>, vector<1x128xf32>
    %4 = vector.broadcast %3 : vector<1x128xf32> to vector<8x128xf32>
    %5 = arith.addf %2, %4 : vector<8x128xf32>
    %cst_5 = arith.constant 0.000000e+00 : f32
    %6 = vector.broadcast %cst_5 : f32 to vector<8x128xf32>
    %7 = arith.maximumf %5, %6 : vector<8x128xf32>
    %c0_6 = arith.constant 0 : index
    %c0_7 = arith.constant 0 : index
    %8 = vector.load %arg3[%c0_6, %c0_7] : memref<128x256xf32, #tpu.memory_space<vmem>>, vector<128x256xf32>
    %cst_8 = arith.constant dense<0.000000e+00> : vector<8x256xf32>
    %9 = tpu.matmul %7, %8, %cst_8 {dimension_numbers = #tpu.dot_dimension_numbers<[1], [0], [0], [1], [0, 0, 1, 1], [], []>} : vector<8x128xf32>, vector<128x256xf32>, vector<8x256xf32> -> vector<8x256xf32>
    %c0_9 = arith.constant 0 : index
    %c0_10 = arith.constant 0 : index
    %10 = vector.load %arg4[%c0_9, %c0_10] : memref<1x256xf32, #tpu.memory_space<vmem>>, vector<1x256xf32>
    %11 = vector.broadcast %10 : vector<1x256xf32> to vector<8x256xf32>
    %12 = arith.addf %9, %11 : vector<8x256xf32>
    %cst_11 = arith.constant 0.000000e+00 : f32
    %13 = vector.broadcast %cst_11 : f32 to vector<8x256xf32>
    %14 = arith.maximumf %12, %13 : vector<8x256xf32>
    %c0_12 = arith.constant 0 : index
    %c0_13 = arith.constant 0 : index
    %15 = vector.load %arg5[%c0_12, %c0_13] : memref<8x256xf32, #tpu.memory_space<vmem>>, vector<8x256xf32>
    tpu.vector_store %arg5[%c0_12, %c0_13], %14 {strides = array<i32>} : memref<8x256xf32, #tpu.memory_space<vmem>>, vector<8x256xf32>,
    return
  }
}

</mosaic_0001>

<llo_original>
// kernel: tpu_custom_call.1
$region0: #{tpu_custom_call.1}
  #allocation0 [shape = 'u32[]', space=smem, size = 0x4, offset = 0x4, fixed_abs, tag = 'smem constant byte address 0x4 - core index']
  #allocation1 [shape = 'u32[144,128]{1,0:T(1,128)}', space=vmem, size = 0x12000, scoped, tag = 'internal scratch']
  %s0 = inlined_call_operand.hbm [shape: f32[8,256], index: 0, kind: input, shape index: {}]
  %s1 = inlined_call_operand.hbm [shape: f32[256,128], index: 1, kind: input, shape index: {}]
  %s2 = inlined_call_operand.vmem [shape: f32[1,128], index: 2, kind: input, shape index: {}]
  %s3 = inlined_call_operand.hbm [shape: f32[128,256], index: 3, kind: input, shape index: {}]
  %s4 = inlined_call_operand.vmem [shape: f32[1,256], index: 4, kind: input, shape index: {}]
  %s5 = inlined_call_operand.hbm [shape: f32[8,256], index: 5, kind: output, shape index: {}]
  %s6 = sld [smem:[#allocation0]]
  $region42: #{tpu_custom_call.1} parent=0
    _
  %s8 = ssub.s32 1, %s6
  %s9 = scalar_select 0, %s8, %s6
  $region1: #{tpu_custom_call.1} parent=0
    #allocation2 [shape = 'u8[8192]{0}', space=vmem, size = 0x2000, scoped, tag = 'input window, operand 0, single buffered']
    #allocation3 [shape = 's32[1]{0}', space=sflag, size = 0x4, scoped, tag = 'scoped memory for tpu_custom_call.1']
    #allocation4 [shape = 's32[1]{0}', space=sflag, size = 0x4, scoped, tag = 'scoped memory for tpu_custom_call.1']
    #allocation5 [shape = 'u8[131072]{0}', space=vmem, size = 0x20000, scoped, tag = 'input window, operand 1, single buffered']
    #allocation6 [shape = 's32[1]{0}', space=sflag, size = 0x4, scoped, tag = 'scoped memory for tpu_custom_call.1']
    #allocation7 [shape = 'u8[131072]{0}', space=vmem, size = 0x20000, scoped, tag = 'input window, operand 3, single buffered']
    #allocation8 [shape = 'u8[8192]{0}', space=vmem, size = 0x2000, scoped, tag = 'output window, operand 0, single buffered']
    %10 = vsyncpa [#allocation3], 0
    %11 = vsyncpa [#allocation6], 0
    %12 = vsyncpa [#allocation4], 0
    // Predicated region
    $region2: #{tpu_custom_call.1} parent=1 // pred_check
      _
    $region3: #{tpu_custom_call.1} parent=1 // pred_check_branch
      %14 = sbr.rel (0) target = $region5
    $region4: #{tpu_custom_call.1} parent=1 // pred_region
      %s16 = ssub.s32 256, 256
      %17 = vsyncadd [#allocation3], %s16
      %s19 = sshll.u32 [#allocation2], 4
      %s20 = int_to_ptr.vmem [resolvable:$true] %s19
      %22 = dma.hbm_to_vmem [thread:$0]  %s0, 256, %s20, [#allocation3]
    $region5: #{tpu_custom_call.1} parent=1 // pred_fallthru
      _
    // Predicated region
    $region6: #{tpu_custom_call.1} parent=1 // pred_check
      _
    $region7: #{tpu_custom_call.1} parent=1 // pred_check_branch
      %24 = sbr.rel (0) target = $region9
    $region8: #{tpu_custom_call.1} parent=1 // pred_region
      %s26 = ssub.s32 4096, 4096
      %27 = vsyncadd [#allocation6], %s26
      %s28 = sshll.u32 [#allocation5], 4
      %s29 = int_to_ptr.vmem [resolvable:$true] %s28
      %34 = dma.hbm_to_vmem [thread:$0]  %s1, 4096, %s29, [#allocation6], 128, 128, 8
    $region9: #{tpu_custom_call.1} parent=1 // pred_fallthru
      _
    // Predicated region
    $region10: #{tpu_custom_call.1} parent=1 // pred_check
      _
    $region11: #{tpu_custom_call.1} parent=1 // pred_check_branch
      %36 = sbr.rel (0) target = $region13
    $region12: #{tpu_custom_call.1} parent=1 // pred_region
      _
    $region13: #{tpu_custom_call.1} parent=1 // pred_fallthru
      _
    // Predicated region
    $region14: #{tpu_custom_call.1} parent=1 // pred_check
      _
    $region15: #{tpu_custom_call.1} parent=1 // pred_check_branch
      %38 = sbr.rel (0) target = $region17
    $region16: #{tpu_custom_call.1} parent=1 // pred_region
      %s40 = ssub.s32 4096, 4096
      %41 = vsyncadd [#allocation6], %s40
      %s42 = sshll.u32 [#allocation7], 4
      %s43 = int_to_ptr.vmem [resolvable:$true] %s42
      %48 = dma.hbm_to_vmem [thread:$0]  %s3, 4096, %s43, [#allocation6], 256, 256, 16
    $region17: #{tpu_custom_call.1} parent=1 // pred_fallthru
      _
    // Predicated region
    $region18: #{tpu_custom_call.1} parent=1 // pred_check
      _
    $region19: #{tpu_custom_call.1} parent=1 // pred_check_branch
      %50 = sbr.rel (0) target = $region21
    $region20: #{tpu_custom_call.1} parent=1 // pred_region
      _
    $region21: #{tpu_custom_call.1} parent=1 // pred_fallthru
      _
    // Predicated region
    $region22: #{tpu_custom_call.1} parent=1 // pred_check
      _
    $region23: #{tpu_custom_call.1} parent=1 // pred_check_branch
      %52 = sbr.rel (0) target = $region25
    $region24: #{tpu_custom_call.1} parent=1 // pred_region
      %53 = dma.done [#allocation3], 256
    $region25: #{tpu_custom_call.1} parent=1 // pred_fallthru
      _
    // Predicated region
    $region26: #{tpu_custom_call.1} parent=1 // pred_check
      _
    $region27: #{tpu_custom_call.1} parent=1 // pred_check_branch
      %55 = sbr.rel (0) target = $region29
    $region28: #{tpu_custom_call.1} parent=1 // pred_region
      %56 = dma.done [#allocation6], 4096
    $region29: #{tpu_custom_call.1} parent=1 // pred_fallthru
      _
    // Predicated region
    $region30: #{tpu_custom_call.1} parent=1 // pred_check
      _
    $region31: #{tpu_custom_call.1} parent=1 // pred_check_branch
      %58 = sbr.rel (0) target = $region33
    $region32: #{tpu_custom_call.1} parent=1 // pred_region
      %59 = dma.done [#allocation6], 4096
    $region33: #{tpu_custom_call.1} parent=1 // pred_fallthru
      _
    %v60 = vld [vmem:[#allocation2] sm:$0xff]
    %v61 = vld [vmem:[#allocation2 + $0x8] sm:$0xff]
    %v62 = vld [vmem:[#allocation5] sm:$0xff]
    %v63 = vld [vmem:[#allocation5 + $0x8] sm:$0xff]
    %v64 = vld [vmem:[#allocation5 + $0x10] sm:$0xff]
    %v65 = vld [vmem:[#allocation5 + $0x18] sm:$0xff]
    %v66 = vld [vmem:[#allocation5 + $0x20] sm:$0xff]
    %v67 = vld [vmem:[#allocation5 + $0x28] sm:$0xff]
    %v68 = vld [vmem:[#allocation5 + $0x30] sm:$0xff]
    %v69 = vld [vmem:[#allocation5 + $0x38] sm:$0xff]
    %v70 = vld [vmem:[#allocation5 + $0x40] sm:$0xff]
    %v71 = vld [vmem:[#allocation5 + $0x48] sm:$0xff]
    %v72 = vld [vmem:[#allocation5 + $0x50] sm:$0xff]
    %v73 = vld [vmem:[#allocation5 + $0x58] sm:$0xff]
    %v74 = vld [vmem:[#allocation5 + $0x60] sm:$0xff]
    %v75 = vld [vmem:[#allocation5 + $0x68] sm:$0xff]
    %v76 = vld [vmem:[#allocation5 + $0x70] sm:$0xff]
    %v77 = vld [vmem:[#allocation5 + $0x78] sm:$0xff]
    %v78 = vld [vmem:[#allocation5 + $0x80] sm:$0xff]
    %v79 = vld [vmem:[#allocation5 + $0x88] sm:$0xff]
    %v80 = vld [vmem:[#allocation5 + $0x90] sm:$0xff]
    %v81 = vld [vmem:[#allocation5 + $0x98] sm:$0xff]
    %v82 = vld [vmem:[#allocation5 + $0xa0] sm:$0xff]
    %v83 = vld [vmem:[#allocation5 + $0xa8] sm:$0xff]
    %v84 = vld [vmem:[#allocation5 + $0xb0] sm:$0xff]
    %v85 = vld [vmem:[#allocation5 + $0xb8] sm:$0xff]
    %v86 = vld [vmem:[#allocation5 + $0xc0] sm:$0xff]
    %v87 = vld [vmem:[#allocation5 + $0xc8] sm:$0xff]
    %v88 = vld [vmem:[#allocation5 + $0xd0] sm:$0xff]
    %v89 = vld [vmem:[#allocation5 + $0xd8] sm:$0xff]
    %v90 = vld [vmem:[#allocation5 + $0xe0] sm:$0xff]
    %v91 = vld [vmem:[#allocation5 + $0xe8] sm:$0xff]
    %v92 = vld [vmem:[#allocation5 + $0xf0] sm:$0xff]
    %v93 = vld [vmem:[#allocation5 + $0xf8] sm:$0xff]
    %v94 = vld [vmem:[%s2] sm:$0x1]
    %v96 = vlaneseq
    %v97 = vshrl.u32 %v96, 7
    %v98 = vsub.s32 0, %v97
    %v99 = vrot.slane %v94, %v98
    %101 = vmatprep.subr.mxu0 0.0
    %102 = vmatpush1.msra.mxu0 %v62
    %103 = vmatprep.subr.mxu0 0.0
    %104 = vmatpush1.msra.mxu0 %v63
    %105 = vmatprep.subr.mxu0 0.0
    %106 = vmatpush1.msra.mxu0 %v64
    %107 = vmatprep.subr.mxu0 0.0
    %108 = vmatpush1.msra.mxu0 %v65
    %109 = vmatprep.subr.mxu0 0.0
    %110 = vmatpush1.msra.mxu0 %v66
    %111 = vmatprep.subr.mxu0 0.0
    %112 = vmatpush1.msra.mxu0 %v67
    %113 = vmatprep.subr.mxu0 0.0
    %114 = vmatpush1.msra.mxu0 %v68
    %115 = vmatprep.subr.mxu0 0.0
    %116 = vmatpush1.msra.mxu0 %v69
    %117 = vmatprep.subr.mxu0 0.0
    %118 = vmatpush1.msra.mxu0 %v70
    %119 = vmatprep.subr.mxu0 0.0
    %120 = vmatpush1.msra.mxu0 %v71
    %121 = vmatprep.subr.mxu0 0.0
    %122 = vmatpush1.msra.mxu0 %v72
    %123 = vmatprep.subr.mxu0 0.0
    %124 = vmatpush1.msra.mxu0 %v73
    %125 = vmatprep.subr.mxu0 0.0
    %126 = vmatpush1.msra.mxu0 %v74
    %127 = vmatprep.subr.mxu0 0.0
    %128 = vmatpush1.msra.mxu0 %v75
    %129 = vmatprep.subr.mxu0 0.0
    %130 = vmatpush1.msra.mxu0 %v76
    %131 = vmatprep.subr.mxu0 0.0
    %132 = vmatpush1.msra.mxu0 %v77
    %133 = vmatprep.subr.mxu0 0.0
    %134 = vmatpush1.msra.mxu0 %v78
    %135 = vmatprep.subr.mxu0 0.0
    %136 = vmatpush1.msra.mxu0 %v79
    %137 = vmatprep.subr.mxu0 0.0
    %138 = vmatpush1.msra.mxu0 %v80
    %139 = vmatprep.subr.mxu0 0.0
    %140 = vmatpush1.msra.mxu0 %v81
    %141 = vmatprep.subr.mxu0 0.0
    %142 = vmatpush1.msra.mxu0 %v82
    %143 = vmatprep.subr.mxu0 0.0
    %144 = vmatpush1.msra.mxu0 %v83
    %145 = vmatprep.subr.mxu0 0.0
    %146 = vmatpush1.msra.mxu0 %v84
    %147 = vmatprep.subr.mxu0 0.0
    %148 = vmatpush1.msra.mxu0 %v85
    %149 = vmatprep.subr.mxu0 0.0
    %150 = vmatpush1.msra.mxu0 %v86
    %151 = vmatprep.subr.mxu0 0.0
    %152 = vmatpush1.msra.mxu0 %v87
    %153 = vmatprep.subr.mxu0 0.0
    %154 = vmatpush1.msra.mxu0 %v88
    %155 = vmatprep.subr.mxu0 0.0
    %156 = vmatpush1.msra.mxu0 %v89
    %157 = vmatprep.subr.mxu0 0.0
    %158 = vmatpush1.msra.mxu0 %v90
    %159 = vmatprep.subr.mxu0 0.0
    %160 = vmatpush1.msra.mxu0 %v91
    %161 = vmatprep.subr.mxu0 0.0
    %162 = vmatpush1.msra.mxu0 %v92
    %163 = vmatprep.subr.mxu0 0.0
    %164 = vmatpush1.msra.mxu0 %v93
    %165 = vmatprep.mubr.f32.mxu0 %v61
    %166 = vmatmul.mubr.f32.gmra.mrb[0].mxu0 %v60
    %v167 = vpop.f32.mrb[0].mxu0
    %v168 = vadd.f32 %v99, %v167
    %v169 = vpop.f32.mrb[0].mxu0
    %170 = vdwg.mxu0
    %v171 = vmax.f32 %v168, 0.0
    %v172 = vld [vmem:[#allocation7] sm:$0xff]
    %v173 = vld [vmem:[#allocation7 + $0x8] sm:$0xff]
    %v174 = vld [vmem:[#allocation7 + $0x10] sm:$0xff]
    %v175 = vld [vmem:[#allocation7 + $0x18] sm:$0xff]
    %v176 = vld [vmem:[#allocation7 + $0x20] sm:$0xff]
    %v177 = vld [vmem:[#allocation7 + $0x28] sm:$0xff]
    %v178 = vld [vmem:[#allocation7 + $0x30] sm:$0xff]
    %v179 = vld [vmem:[#allocation7 + $0x38] sm:$0xff]
    %v180 = vld [vmem:[#allocation7 + $0x40] sm:$0xff]
    %v181 = vld [vmem:[#allocation7 + $0x48] sm:$0xff]
    %v182 = vld [vmem:[#allocation7 + $0x50] sm:$0xff]
    %v183 = vld [vmem:[#allocation7 + $0x58] sm:$0xff]
    %v184 = vld [vmem:[#allocation7 + $0x60] sm:$0xff]
    %v185 = vld [vmem:[#allocation7 + $0x68] sm:$0xff]
    %v186 = vld [vmem:[#allocation7 + $0x70] sm:$0xff]
    %v187 = vld [vmem:[#allocation7 + $0x78] sm:$0xff]
    %v188 = vld [vmem:[#allocation7 + $0x80] sm:$0xff]
    %v189 = vld [vmem:[#allocation7 + $0x88] sm:$0xff]
    %v190 = vld [vmem:[#allocation7 + $0x90] sm:$0xff]
    %v191 = vld [vmem:[#allocation7 + $0x98] sm:$0xff]
    %v192 = vld [vmem:[#allocation7 + $0xa0] sm:$0xff]
    %v193 = vld [vmem:[#allocation7 + $0xa8] sm:$0xff]
    %v194 = vld [vmem:[#allocation7 + $0xb0] sm:$0xff]
    %v195 = vld [vmem:[#allocation7 + $0xb8] sm:$0xff]
    %v196 = vld [vmem:[#allocation7 + $0xc0] sm:$0xff]
    %v197 = vld [vmem:[#allocation7 + $0xc8] sm:$0xff]
    %v198 = vld [vmem:[#allocation7 + $0xd0] sm:$0xff]
    %v199 = vld [vmem:[#allocation7 + $0xd8] sm:$0xff]
    %v200 = vld [vmem:[#allocation7 + $0xe0] sm:$0xff]
    %v201 = vld [vmem:[#allocation7 + $0xe8] sm:$0xff]
    %v202 = vld [vmem:[#allocation7 + $0xf0] sm:$0xff]
    %v203 = vld [vmem:[#allocation7 + $0xf8] sm:$0xff]
    %v204 = vld [vmem:[%s4] sm:$0x3]
    %v206 = vlaneseq
    %v207 = vshrl.u32 %v206, 7
    %v208 = vsub.s32 0, %v207
    %v209 = vrot.slane %v204, %v208
    %v210 = vlaneseq
    %v211 = vshrl.u32 %v210, 7
    %v212 = vsub.s32 1, %v211
    %v213 = vrot.slane %v204, %v212
    %216 = vmatprep.subr.mxu0 %v173
    %217 = vmatpush1.msra.mxu0 %v172
    %218 = vmatprep.subr.mxu0 %v175
    %219 = vmatpush1.msra.mxu0 %v174
    %220 = vmatprep.subr.mxu0 %v177
    %221 = vmatpush1.msra.mxu0 %v176
    %222 = vmatprep.subr.mxu0 %v179
    %223 = vmatpush1.msra.mxu0 %v178
    %224 = vmatprep.subr.mxu0 %v181
    %225 = vmatpush1.msra.mxu0 %v180
    %226 = vmatprep.subr.mxu0 %v183
    %227 = vmatpush1.msra.mxu0 %v182
    %228 = vmatprep.subr.mxu0 %v185
    %229 = vmatpush1.msra.mxu0 %v184
    %230 = vmatprep.subr.mxu0 %v187
    %231 = vmatpush1.msra.mxu0 %v186
    %232 = vmatprep.subr.mxu0 %v189
    %233 = vmatpush1.msra.mxu0 %v188
    %234 = vmatprep.subr.mxu0 %v191
    %235 = vmatpush1.msra.mxu0 %v190
    %236 = vmatprep.subr.mxu0 %v193
    %237 = vmatpush1.msra.mxu0 %v192
    %238 = vmatprep.subr.mxu0 %v195
    %239 = vmatpush1.msra.mxu0 %v194
    %240 = vmatprep.subr.mxu0 %v197
    %241 = vmatpush1.msra.mxu0 %v196
    %242 = vmatprep.subr.mxu0 %v199
    %243 = vmatpush1.msra.mxu0 %v198
    %244 = vmatprep.subr.mxu0 %v201
    %245 = vmatpush1.msra.mxu0 %v200
    %246 = vmatprep.subr.mxu0 %v203
    %247 = vmatpush1.msra.mxu0 %v202
    %248 = vmatprep.subr.mxu0 0.0
    %249 = vmatpush1.msra.mxu0 0.0
    %250 = vmatprep.subr.mxu0 0.0
    %251 = vmatpush1.msra.mxu0 0.0
    %252 = vmatprep.subr.mxu0 0.0
    %253 = vmatpush1.msra.mxu0 0.0
    %254 = vmatprep.subr.mxu0 0.0
    %255 = vmatpush1.msra.mxu0 0.0
    %256 = vmatprep.subr.mxu0 0.0
    %257 = vmatpush1.msra.mxu0 0.0
    %258 = vmatprep.subr.mxu0 0.0
    %259 = vmatpush1.msra.mxu0 0.0
    %260 = vmatprep.subr.mxu0 0.0
    %261 = vmatpush1.msra.mxu0 0.0
    %262 = vmatprep.subr.mxu0 0.0
    %263 = vmatpush1.msra.mxu0 0.0
    %264 = vmatprep.subr.mxu0 0.0
    %265 = vmatpush1.msra.mxu0 0.0
    %266 = vmatprep.subr.mxu0 0.0
    %267 = vmatpush1.msra.mxu0 0.0
    %268 = vmatprep.subr.mxu0 0.0
    %269 = vmatpush1.msra.mxu0 0.0
    %270 = vmatprep.subr.mxu0 0.0
    %271 = vmatpush1.msra.mxu0 0.0
    %272 = vmatprep.subr.mxu0 0.0
    %273 = vmatpush1.msra.mxu0 0.0
    %274 = vmatprep.subr.mxu0 0.0
    %275 = vmatpush1.msra.mxu0 0.0
    %276 = vmatprep.subr.mxu0 0.0
    %277 = vmatpush1.msra.mxu0 0.0
    %278 = vmatprep.subr.mxu0 0.0
    %279 = vmatpush1.msra.mxu0 0.0
    %280 = vmatprep.mubr.f32.mxu0 0.0
    %281 = vmatmul.mubr.f32.gmra.mrb[0].mxu0 %v171
    %v282 = vpop.f32.mrb[0].mxu0
    %v283 = vadd.f32 %v209, %v282
    %v284 = vpop.f32.mrb[0].mxu0
    %v285 = vadd.f32 %v213, %v284
    %286 = vdwg.mxu0
    %v287 = vmax.f32 %v283, 0.0
    %v288 = vmax.f32 %v285, 0.0
    %289 = vst [vmem:[#allocation8] sm:$0xff] %v287
    %290 = vst [vmem:[#allocation8 + $0x8] sm:$0xff] %v288
    // Predicated region
    $region34: #{tpu_custom_call.1} parent=1 // pred_check
      _
    $region35: #{tpu_custom_call.1} parent=1 // pred_check_branch
      %292 = sbr.rel (0) target = $region37
    $region36: #{tpu_custom_call.1} parent=1 // pred_region
      %s294 = ssub.s32 256, 256
      %295 = vsyncadd [#allocation4], %s294
      %s297 = sshll.u32 [#allocation8], 4
      %s298 = int_to_ptr.vmem [resolvable:$true] %s297
      %300 = dma.vmem_to_hbm [thread:$0]  %s298, 256, %s5, [#allocation4]
    $region37: #{tpu_custom_call.1} parent=1 // pred_fallthru
      _
    // Predicated region
    $region38: #{tpu_custom_call.1} parent=1 // pred_check
      _
    $region39: #{tpu_custom_call.1} parent=1 // pred_check_branch
      %302 = sbr.rel (0) target = $region41
    $region40: #{tpu_custom_call.1} parent=1 // pred_region
      %303 = dma.done [#allocation4], 256
    $region41: #{tpu_custom_call.1} parent=1 // pred_fallthru
      _
    %304 = vsyncpa [#allocation3], 1
    %305 = vsyncpa [#allocation6], 1
    %306 = vsyncpa [#allocation4], 1

</llo_original>
